<compile_context>
chip_gen: v7x
topology: tpu7x:2x2x1
jax: 0.10.0
libtpu: 0.0.40
codegen_flags: <defaults>
</compile_context>

<pallas_src>
import jax
import jax.numpy as jnp
from jax.experimental import pallas as pl
from jax.experimental.pallas import tpu as pltpu


def _round_up(n, m):
    return ((n + m - 1) // m) * m


_VMEM_LIMIT = 32 * 1024 * 1024  # fits v5e scoped / v6e / v7x (64 MiB physical)


# ----------------------- kernel 1: sequential LSTM cell -----------------------
def lstm_recurrence_kernel(x_ref,          # (U, Bp, Dp) f32  streamed embeddings
                           h0_ref, c0_ref,  # (Bp, Hp)    f32  resident
                           w_xh_ref,        # (Dp+Hp, 4Hp) bf16 fused [w_ih; w_hh]^T
                           b_g_ref,         # (1, 4Hp)    f32  fused gate bias
                           hseq_ref,        # (U, Bp, Hp) f32  per-block output
                           c_out_ref,       # (Bp, Hp)    f32  final cell state
                           xh_buf,          # scratch (Bp, Dp+Hp) f32 persistent
                           c_buf):          # scratch (Bp, Hp)    f32 persistent
    U, _, Dp = x_ref.shape
    Hp = c_buf.shape[-1]
    mm_dtype = w_xh_ref.dtype

    # Load the initial hidden state into the persistent carries once.
    @pl.when(pl.program_id(0) == 0)
    def _():
        xh_buf[:, Dp:] = h0_ref[...]
        c_buf[...] = c0_ref[...]

    # TODO(synk): nn.Dropout treated as identity (inference mode).
    for u in range(U):                       # static unroll of U time steps
        xh_buf[:, :Dp] = x_ref[u]            # refresh x-half of the xh buffer
        gates = jnp.dot(xh_buf[...].astype(mm_dtype), w_xh_ref[...],
                        preferred_element_type=jnp.float32) + b_g_ref[...]
        # Lane-aligned gate slices (Hp multiple of 128); PyTorch order i,f,g,o.
        i_g = jax.nn.sigmoid(gates[:, 0 * Hp:1 * Hp])
        f_g = jax.nn.sigmoid(gates[:, 1 * Hp:2 * Hp])
        g_g = jnp.tanh(gates[:, 2 * Hp:3 * Hp])
        o_g = jax.nn.sigmoid(gates[:, 3 * Hp:4 * Hp])
        c_new = f_g * c_buf[...] + i_g * g_g
        h_new = o_g * jnp.tanh(c_new)
        hseq_ref[u] = h_new                  # dense lane-aligned store
        xh_buf[:, Dp:] = h_new               # carry h into next step in place
        c_buf[...] = c_new

    c_out_ref[...] = c_buf[...]


# ------------------ kernel 2: batched, tiled output projection ----------------
def projection_kernel(h_ref,       # (tm, Hp)  f32
                      w_e_ref,     # (Hp, Dp)  bf16  to_word_emb weight^T
                      b_e_ref,     # (1, Dp)   f32
                      emb_t_ref,   # (Dp, tv)  bf16  tied emb^T (V tile)
                      b_lin_ref,   # (1, tv)   f32
                      out_ref,     # (tm, tv)  f32
                      we_buf):     # scratch (tm, Dp) bf16
    # ReLU(h @ w_e^T + b_e) computed once per M-tile, reused for all V tiles.
    @pl.when(pl.program_id(1) == 0)
    def _():
        we = jnp.dot(h_ref[...].astype(w_e_ref.dtype), w_e_ref[...],
                     preferred_element_type=jnp.float32) + b_e_ref[...]
        we_buf[...] = jnp.maximum(we, 0.0).astype(we_buf.dtype)

    out_ref[...] = (jnp.dot(we_buf[...], emb_t_ref[...],
                            preferred_element_type=jnp.float32)
                    + b_lin_ref[...])


# ----------------------------- parameter plumbing -----------------------------
def prepare_params(params, matmul_dtype=jnp.bfloat16):
    """One-time layout plumbing: pad to (8,128) tiles, pre-transpose, fuse,
    and cast matmul weights to the MXU-native dtype (f32 accumulation kept)."""
    emb_w = params["emb_w"].astype(jnp.float32)
    w_ih = params["w_ih"]
    w_hh = params["w_hh"]
    V, D = emb_w.shape
    H = w_hh.shape[1]
    Vp, Dp, Hp = _round_up(V, 128), _round_up(D, 128), _round_up(H, 128)

    # f32 table (padded along D only) for the host-side embedding pre-gather.
    emb_pad = jnp.zeros((V, Dp), jnp.float32).at[:, :D].set(emb_w)
    # Tied output-projection weight, pre-transposed (streamed in V tiles).
    emb_t = jnp.zeros((Dp, Vp), jnp.float32).at[:D, :V].set(emb_w.T)

    # Fused, pre-transposed LSTM weight: rows [0:D] take w_ih^T, rows
    # [Dp:Dp+H] take w_hh^T; each gate occupies a lane-aligned Hp-wide slot.
    w_xh = jnp.zeros((Dp + Hp, 4 * Hp), jnp.float32)
    b_g = jnp.zeros((1, 4 * Hp), jnp.float32)
    b_sum = params["b_ih"] + params["b_hh"]
    for g in range(4):
        w_xh = w_xh.at[:D, g * Hp:g * Hp + H].set(w_ih[g * H:(g + 1) * H, :].T)
        w_xh = w_xh.at[Dp:Dp + H, g * Hp:g * Hp + H].set(w_hh[g * H:(g + 1) * H, :].T)
        b_g = b_g.at[0, g * Hp:g * Hp + H].set(b_sum[g * H:(g + 1) * H])

    w_e_t = jnp.zeros((Hp, Dp), jnp.float32).at[:H, :D].set(params["w_e"].T)
    b_e = jnp.zeros((1, Dp), jnp.float32).at[0, :D].set(params["b_e"])
    b_lin = jnp.zeros((1, Vp), jnp.float32).at[0, :V].set(params["b_lin"])

    return {"emb_pad": emb_pad,
            "emb_t": emb_t.astype(matmul_dtype),
            "w_xh": w_xh.astype(matmul_dtype),
            "b_g": b_g,
            "w_e_t": w_e_t.astype(matmul_dtype),
            "b_e": b_e,
            "b_lin": b_lin,
            "dims": (V, D, H, Vp, Dp, Hp)}


# --------------------------------- wrappers -----------------------------------
def generator_decode(token_seq, hidden, prep):
    """token_seq: (T, B) int ids; hidden: (h0, c0) each (1, B, H).

    Equivalent to calling the PyTorch module forward T times (teacher forced).
    Returns logits (T, B, V) and final hidden ((1,B,H), (1,B,H)).
    """
    V, D, H, Vp, Dp, Hp = prep["dims"]
    T, B = token_seq.shape
    Bp = _round_up(max(B, 8), 8)
    h0, c0 = hidden

    ids = jnp.zeros((T, Bp), jnp.int32).at[:, :B].set(token_seq.astype(jnp.int32))
    # Pre-gather embeddings for the whole sequence; streamed per grid block.
    x_seq = prep["emb_pad"][ids]                                  # (T, Bp, Dp) f32
    h0p = jnp.zeros((Bp, Hp), jnp.float32).at[:B, :H].set(h0[0])
    c0p = jnp.zeros((Bp, Hp), jnp.float32).at[:B, :H].set(c0[0])

    # Time-step unroll factor per grid iteration (amortize per-step overhead).
    U = 1
    for cand in (4, 2):
        if T % cand == 0:
            U = cand
            break

    wsz = int(prep["w_xh"].dtype.itemsize)
    rec_flops = 2 * T * Bp * (Dp + Hp) * 4 * Hp
    rec_trans = 5 * T * Bp * Hp
    rec_bytes = (4 * (T * Bp * Dp + T * Bp * Hp + 4 * Bp * Hp + 4 * Hp)
                 + wsz * (Dp + Hp) * 4 * Hp)

    const2 = lambda t: (0, 0)
    h_seq, cTp = pl.pallas_call(
        lstm_recurrence_kernel,
        out_shape=(jax.ShapeDtypeStruct((T, Bp, Hp), jnp.float32),
                   jax.ShapeDtypeStruct((Bp, Hp), jnp.float32)),
        grid=(T // U,),
        in_specs=[
            pl.BlockSpec((U, Bp, Dp), lambda t: (t, 0, 0)),   # streamed embeddings
            pl.BlockSpec((Bp, Hp), const2),                   # h0
            pl.BlockSpec((Bp, Hp), const2),                   # c0
            pl.BlockSpec((Dp + Hp, 4 * Hp), const2),          # fused [w_ih; w_hh]^T
            pl.BlockSpec((1, 4 * Hp), const2),                # fused gate bias
        ],
        out_specs=(
            pl.BlockSpec((U, Bp, Hp), lambda t: (t, 0, 0)),   # per-step hidden states
            pl.BlockSpec((Bp, Hp), const2),                   # final cell state
        ),
        scratch_shapes=[pltpu.VMEM((Bp, Dp + Hp), jnp.float32),
                        pltpu.VMEM((Bp, Hp), jnp.float32)],
        compiler_params=pltpu.CompilerParams(
            dimension_semantics=("arbitrary",),
            vmem_limit_bytes=_VMEM_LIMIT),
        cost_estimate=pl.CostEstimate(flops=rec_flops,
                                      transcendentals=rec_trans,
                                      bytes_accessed=rec_bytes),
    )(x_seq, h0p, c0p, prep["w_xh"], prep["b_g"])

    # ---- projections batched over all T*Bp rows, tiled & parallel ----
    M = T * Bp
    h2d = h_seq.reshape(M, Hp)
    tm = 8
    for cand in (256, 128, 64, 32, 16, 8):
        if M % cand == 0:
            tm = cand
            break
    tv = 128
    for cand in (512, 256, 128):
        if Vp % cand == 0:
            tv = cand
            break

    proj_flops = 2 * M * (Hp * Dp + Dp * Vp)
    proj_bytes = 4 * (M * Hp + Dp + Vp + M * Vp) + wsz * (Hp * Dp + Dp * Vp)

    logits2d = pl.pallas_call(
        projection_kernel,
        out_shape=jax.ShapeDtypeStruct((M, Vp), jnp.float32),
        grid=(M // tm, Vp // tv),
        in_specs=[
            pl.BlockSpec((tm, Hp), lambda m, v: (m, 0)),      # hidden states
            pl.BlockSpec((Hp, Dp), lambda m, v: (0, 0)),      # w_e^T (resident)
            pl.BlockSpec((1, Dp), lambda m, v: (0, 0)),       # b_e
            pl.BlockSpec((Dp, tv), lambda m, v: (0, v)),      # tied emb^T (V tile)
            pl.BlockSpec((1, tv), lambda m, v: (0, v)),       # b_lin (V tile)
        ],
        out_specs=pl.BlockSpec((tm, tv), lambda m, v: (m, v)),
        scratch_shapes=[pltpu.VMEM((tm, Dp), prep["w_e_t"].dtype)],
        compiler_params=pltpu.CompilerParams(
            dimension_semantics=("parallel", "arbitrary"),
            vmem_limit_bytes=_VMEM_LIMIT),
        cost_estimate=pl.CostEstimate(flops=proj_flops, transcendentals=0,
                                      bytes_accessed=proj_bytes),
    )(h2d, prep["w_e_t"], prep["b_e"], prep["emb_t"], prep["b_lin"])

    logits = logits2d.reshape(T, Bp, Vp)[:, :B, :V]
    h1 = h_seq[-1, :B, :H][None]
    c1 = cTp[:B, :H][None]
    return logits, (h1, c1)


def generator_forward(target_word, hidden, prep):
    """Single decode step — matches Generator.forward(target_word, hidden)."""
    return generator_decode(target_word.astype(jnp.int32)[None, :], hidden, prep)


# ----------------------------- pure-JAX reference -----------------------------
def _reference_step(tok, h, c, params):
    H = h.shape[-1]
    x = params["emb_w"][tok]
    gates = (x @ params["w_ih"].T + params["b_ih"]
             + h @ params["w_hh"].T + params["b_hh"])
    i_g = jax.nn.sigmoid(gates[:, 0:H])
    f_g = jax.nn.sigmoid(gates[:, H:2 * H])
    g_g = jnp.tanh(gates[:, 2 * H:3 * H])
    o_g = jax.nn.sigmoid(gates[:, 3 * H:4 * H])
    c1 = f_g * c + i_g * g_g
    h1 = o_g * jnp.tanh(c1)
    we = jnp.maximum(h1 @ params["w_e"].T + params["b_e"], 0.0)
    logits = we @ params["emb_w"].T + params["b_lin"]
    return logits, h1, c1


def _reference_decode(token_seq, hidden, params):
    h, c = hidden[0][0], hidden[1][0]
    outs = []
    for t in range(token_seq.shape[0]):
        logits, h, c = _reference_step(token_seq[t], h, c, params)
        outs.append(logits)
    return jnp.stack(outs, axis=0), (h[None], c[None])


if __name__ == "__main__":
    # Small shapes consistent with the module (scaled down from 150/300 defaults).
    V = 64          # n_target_vocab
    D = 32          # d_word_vec
    d_inner = 31    # d_inner_hid
    c_dim = 1
    H = d_inner + c_dim   # LSTM hidden size = 32
    B = 2
    T = 8           # decode sequence length handled in one recurrence call
    n_layers = 1

    key = jax.random.PRNGKey(0)
    ks = jax.random.split(key, 12)
    initrange = 0.1
    lstm_r = 1.0 / float(H) ** 0.5

    params = {
        # Embedding weight (tied with output `linear.weight`): uniform(-0.1, 0.1)
        "emb_w": jax.random.uniform(ks[0], (V, D), jnp.float32, -initrange, initrange),
        # LSTM weights/biases (PyTorch default uniform(-1/sqrt(H), 1/sqrt(H)))
        "w_ih": jax.random.uniform(ks[1], (4 * H, D), jnp.float32, -lstm_r, lstm_r),
        "w_hh": jax.random.uniform(ks[2], (4 * H, H), jnp.float32, -lstm_r, lstm_r),
        "b_ih": jax.random.uniform(ks[3], (4 * H,), jnp.float32, -lstm_r, lstm_r),
        "b_hh": jax.random.uniform(ks[4], (4 * H,), jnp.float32, -lstm_r, lstm_r),
        # to_word_emb Linear(H -> D): weight uniform(-0.1, 0.1) per init_weights
        "w_e": jax.random.uniform(ks[5], (D, H), jnp.float32, -initrange, initrange),
        "b_e": jax.random.uniform(ks[6], (D,), jnp.float32, -lstm_r, lstm_r),
        # output linear bias (weight is tied to emb_w)
        "b_lin": jax.random.uniform(ks[7], (V,), jnp.float32, -initrange, initrange),
    }

    token_seq = jax.random.randint(ks[8], (T, B), 0, V, dtype=jnp.int32)
    h0 = 0.1 * jax.random.normal(ks[9], (n_layers, B, H), jnp.float32)
    c0 = 0.1 * jax.random.normal(ks[10], (n_layers, B, H), jnp.float32)

    prep = prepare_params(params)   # bf16 matmul weights, f32 accumulation

    # 1) Single step == the PyTorch module forward.
    logits1, (h1, c1) = generator_forward(token_seq[0], (h0, c0), prep)
    jax.block_until_ready((logits1, h1, c1))
    ref1, (rh1, rc1) = _reference_decode(token_seq[:1], (h0, c0), params)
    assert logits1.shape == (1, B, V) and h1.shape == (1, B, H) and c1.shape == (1, B, H)
    # Tolerances loosened vs f32 because matmul weights/activations are bf16.
    assert jnp.allclose(logits1, ref1, atol=2e-2)
    assert jnp.allclose(h1, rh1, atol=1e-2)
    assert jnp.allclose(c1, rc1, atol=1e-2)

    # 2) Full teacher-forced sequence: one recurrence call + one projection call.
    logits, (hT, cT) = generator_decode(token_seq, (h0, c0), prep)
    jax.block_until_ready((logits, hT, cT))
    ref, (rhT, rcT) = _reference_decode(token_seq, (h0, c0), params)
    assert logits.shape == (T, B, V)
    assert jnp.allclose(logits, ref, atol=2e-2)
    assert jnp.allclose(hT, rhT, atol=1e-2)
    assert jnp.allclose(cT, rcT, atol=1e-2)

    print("KERNEL_OK")
</pallas_src>

<mosaic_0001>
module attributes {stable_mosaic.version = 11 : i64} {
  func.func @lstm_recurrence_kernel(%arg0: i32, %arg1: memref<1x8x128xf32, #tpu.memory_space<vmem>>, %arg2: memref<8x128xf32, #tpu.memory_space<vmem>>, %arg3: memref<8x128xf32, #tpu.memory_space<vmem>>, %arg4: memref<256x512xbf16, #tpu.memory_space<vmem>>, %arg5: memref<1x512xf32, #tpu.memory_space<vmem>>, %arg6: memref<1x8x128xf32, #tpu.memory_space<vmem>>, %arg7: memref<8x128xf32, #tpu.memory_space<vmem>>, %arg8: memref<8x256xf32, #tpu.memory_space<vmem>>, %arg9: memref<8x128xf32, #tpu.memory_space<vmem>>) attributes {dimension_semantics = [#tpu.dimension_semantics<arbitrary>], iteration_bounds = array<i64: 1>, scalar_prefetch = 0 : i64, scratch_operands = 2 : i64, tpu.core_type = #tpu.core_type<tc>, window_params = [{transform_indices = @transform_0, window_bounds = array<i64: 1, 8, 128>}, {pipeline_mode = #tpu.pipeline_mode<synchronous>, transform_indices = @transform_1, window_bounds = array<i64: 8, 128>}, {pipeline_mode = #tpu.pipeline_mode<synchronous>, transform_indices = @transform_2, window_bounds = array<i64: 8, 128>}, {pipeline_mode = #tpu.pipeline_mode<synchronous>, transform_indices = @transform_3, window_bounds = array<i64: 256, 512>}, {pipeline_mode = #tpu.pipeline_mode<synchronous>, transform_indices = @transform_4, window_bounds = array<i64: 1, 512>}, {transform_indices = @transform_5, window_bounds = array<i64: 1, 8, 128>}, {pipeline_mode = #tpu.pipeline_mode<synchronous>, transform_indices = @transform_6, window_bounds = array<i64: 8, 128>}]} {
    %c0_i32 = arith.constant 0 : i32
    %0 = arith.cmpi eq, %arg0, %c0_i32 : i32
    %1 = arith.extui %0 : i1 to i32
    %c0_i32_0 = arith.constant 0 : i32
    %2 = arith.cmpi ne, %1, %c0_i32_0 : i32
    scf.if %2 {
      %c0_26 = arith.constant 0 : index
      %c0_27 = arith.constant 0 : index
      %46 = vector.load %arg2[%c0_26, %c0_27] : memref<8x128xf32, #tpu.memory_space<vmem>>, vector<8x128xf32>
      %c0_28 = arith.constant 0 : index
      %c128_29 = arith.constant 128 : index
      %47 = vector.load %arg8[%c0_28, %c128_29] : memref<8x256xf32, #tpu.memory_space<vmem>>, vector<8x128xf32>
      tpu.vector_store %arg8[%c0_28, %c128_29], %46 {strides = array<i32>} : memref<8x256xf32, #tpu.memory_space<vmem>>, vector<8x128xf32>,
      %c0_30 = arith.constant 0 : index
      %c0_31 = arith.constant 0 : index
      %48 = vector.load %arg3[%c0_30, %c0_31] : memref<8x128xf32, #tpu.memory_space<vmem>>, vector<8x128xf32>
      %c0_32 = arith.constant 0 : index
      %c0_33 = arith.constant 0 : index
      %49 = vector.load %arg9[%c0_32, %c0_33] : memref<8x128xf32, #tpu.memory_space<vmem>>, vector<8x128xf32>
      tpu.vector_store %arg9[%c0_32, %c0_33], %48 {strides = array<i32>} : memref<8x128xf32, #tpu.memory_space<vmem>>, vector<8x128xf32>,
    } else {
    }
    %c0 = arith.constant 0 : index
    %c0_1 = arith.constant 0 : index
    %c0_2 = arith.constant 0 : index
    %3 = vector.load %arg1[%c0, %c0_1, %c0_2] : memref<1x8x128xf32, #tpu.memory_space<vmem>>, vector<1x8x128xf32>
    %4 = vector.shape_cast %3 : vector<1x8x128xf32> to vector<8x128xf32>
    %c0_3 = arith.constant 0 : index
    %c0_4 = arith.constant 0 : index
    %5 = vector.load %arg8[%c0_3, %c0_4] : memref<8x256xf32, #tpu.memory_space<vmem>>, vector<8x128xf32>
    tpu.vector_store %arg8[%c0_3, %c0_4], %4 {strides = array<i32>} : memref<8x256xf32, #tpu.memory_space<vmem>>, vector<8x128xf32>,
    %c0_5 = arith.constant 0 : index
    %c0_6 = arith.constant 0 : index
    %6 = vector.load %arg8[%c0_5, %c0_6] : memref<8x256xf32, #tpu.memory_space<vmem>>, vector<8x256xf32>
    %7 = arith.truncf %6 : vector<8x256xf32> to vector<8x256xbf16>
    %c0_7 = arith.constant 0 : index
    %c0_8 = arith.constant 0 : index
    %8 = vector.load %arg4[%c0_7, %c0_8] : memref<256x512xbf16, #tpu.memory_space<vmem>>, vector<256x512xbf16>
    %cst = arith.constant dense<0.000000e+00> : vector<8x512xf32>
    %9 = tpu.matmul %7, %8, %cst {dimension_numbers = #tpu.dot_dimension_numbers<[1], [0], [0], [1], [0, 0, 1, 1], [], []>} : vector<8x256xbf16>, vector<256x512xbf16>, vector<8x512xf32> -> vector<8x512xf32>
    %c0_9 = arith.constant 0 : index
    %c0_10 = arith.constant 0 : index
    %10 = vector.load %arg5[%c0_9, %c0_10] : memref<1x512xf32, #tpu.memory_space<vmem>>, vector<1x512xf32>
    %11 = vector.broadcast %10 : vector<1x512xf32> to vector<8x512xf32>
    %12 = arith.addf %9, %11 : vector<8x512xf32>
    %13 = vector.extract_strided_slice %12 {offsets = [0, 0], sizes = [8, 128], strides = [1, 1]} : vector<8x512xf32> to vector<8x128xf32>
    %14 = arith.negf %13 : vector<8x128xf32>
    %15 = math.exp %14 : vector<8x128xf32>
    %cst_11 = arith.constant 1.000000e+00 : f32
    %16 = vector.broadcast %cst_11 : f32 to vector<8x128xf32>
    %17 = arith.addf %16, %15 : vector<8x128xf32>
    %18 = arith.divf %16, %17 : vector<8x128xf32>
    %19 = vector.extract_strided_slice %12 {offsets = [0, 128], sizes = [8, 128], strides = [1, 1]} : vector<8x512xf32> to vector<8x128xf32>
    %20 = arith.negf %19 : vector<8x128xf32>
    %21 = math.exp %20 : vector<8x128xf32>
    %cst_12 = arith.constant 1.000000e+00 : f32
    %22 = vector.broadcast %cst_12 : f32 to vector<8x128xf32>
    %23 = arith.addf %22, %21 : vector<8x128xf32>
    %24 = arith.divf %22, %23 : vector<8x128xf32>
    %25 = vector.extract_strided_slice %12 {offsets = [0, 256], sizes = [8, 128], strides = [1, 1]} : vector<8x512xf32> to vector<8x128xf32>
    %26 = math.tanh %25 : vector<8x128xf32>
    %27 = vector.extract_strided_slice %12 {offsets = [0, 384], sizes = [8, 128], strides = [1, 1]} : vector<8x512xf32> to vector<8x128xf32>
    %28 = arith.negf %27 : vector<8x128xf32>
    %29 = math.exp %28 : vector<8x128xf32>
    %cst_13 = arith.constant 1.000000e+00 : f32
    %30 = vector.broadcast %cst_13 : f32 to vector<8x128xf32>
    %31 = arith.addf %30, %29 : vector<8x128xf32>
    %32 = arith.divf %30, %31 : vector<8x128xf32>
    %c0_14 = arith.constant 0 : index
    %c0_15 = arith.constant 0 : index
    %33 = vector.load %arg9[%c0_14, %c0_15] : memref<8x128xf32, #tpu.memory_space<vmem>>, vector<8x128xf32>
    %34 = arith.mulf %24, %33 : vector<8x128xf32>
    %35 = arith.mulf %18, %26 : vector<8x128xf32>
    %36 = arith.addf %34, %35 : vector<8x128xf32>
    %37 = math.tanh %36 : vector<8x128xf32>
    %38 = arith.mulf %32, %37 : vector<8x128xf32>
    %c0_16 = arith.constant 0 : index
    %c0_17 = arith.constant 0 : index
    %c0_18 = arith.constant 0 : index
    %39 = vector.load %arg6[%c0_16, %c0_17, %c0_18] : memref<1x8x128xf32, #tpu.memory_space<vmem>>, vector<1x8x128xf32>
    %40 = vector.shape_cast %39 : vector<1x8x128xf32> to vector<8x128xf32>
    %41 = vector.shape_cast %38 : vector<8x128xf32> to vector<1x8x128xf32>
    tpu.vector_store %arg6[%c0_16, %c0_17, %c0_18], %41 {strides = array<i32>} : memref<1x8x128xf32, #tpu.memory_space<vmem>>, vector<1x8x128xf32>,
    %c0_19 = arith.constant 0 : index
    %c128 = arith.constant 128 : index
    %42 = vector.load %arg8[%c0_19, %c128] : memref<8x256xf32, #tpu.memory_space<vmem>>, vector<8x128xf32>
    tpu.vector_store %arg8[%c0_19, %c128], %38 {strides = array<i32>} : memref<8x256xf32, #tpu.memory_space<vmem>>, vector<8x128xf32>,
    %c0_20 = arith.constant 0 : index
    %c0_21 = arith.constant 0 : index
    %43 = vector.load %arg9[%c0_20, %c0_21] : memref<8x128xf32, #tpu.memory_space<vmem>>, vector<8x128xf32>
    tpu.vector_store %arg9[%c0_20, %c0_21], %36 {strides = array<i32>} : memref<8x128xf32, #tpu.memory_space<vmem>>, vector<8x128xf32>,
    %c0_22 = arith.constant 0 : index
    %c0_23 = arith.constant 0 : index
    %44 = vector.load %arg9[%c0_22, %c0_23] : memref<8x128xf32, #tpu.memory_space<vmem>>, vector<8x128xf32>
    %c0_24 = arith.constant 0 : index
    %c0_25 = arith.constant 0 : index
    %45 = vector.load %arg7[%c0_24, %c0_25] : memref<8x128xf32, #tpu.memory_space<vmem>>, vector<8x128xf32>
    tpu.vector_store %arg7[%c0_24, %c0_25], %44 {strides = array<i32>} : memref<8x128xf32, #tpu.memory_space<vmem>>, vector<8x128xf32>,
    return
  }
  func.func @transform_0(%arg0: i32) -> (i32, i32, i32) {
    %c0_i32 = arith.constant 0 : i32
    %c0_i32_0 = arith.constant 0 : i32
    %c0_i32_1 = arith.constant 0 : i32
    return %arg0, %c0_i32, %c0_i32_0 : i32, i32, i32
  }
  func.func @transform_1(%arg0: i32) -> (i32, i32) {
    %c0_i32 = arith.constant 0 : i32
    %c0_i32_0 = arith.constant 0 : i32
    %c0_i32_1 = arith.constant 0 : i32
    return %c0_i32, %c0_i32_0 : i32, i32
  }
  func.func @transform_2(%arg0: i32) -> (i32, i32) {
    %c0_i32 = arith.constant 0 : i32
    %c0_i32_0 = arith.constant 0 : i32
    %c0_i32_1 = arith.constant 0 : i32
    return %c0_i32, %c0_i32_0 : i32, i32
  }
  func.func @transform_3(%arg0: i32) -> (i32, i32) {
    %c0_i32 = arith.constant 0 : i32
    %c0_i32_0 = arith.constant 0 : i32
    %c0_i32_1 = arith.constant 0 : i32
    return %c0_i32, %c0_i32_0 : i32, i32
  }
  func.func @transform_4(%arg0: i32) -> (i32, i32) {
    %c0_i32 = arith.constant 0 : i32
    %c0_i32_0 = arith.constant 0 : i32
    %c0_i32_1 = arith.constant 0 : i32
    return %c0_i32, %c0_i32_0 : i32, i32
  }
  func.func @transform_5(%arg0: i32) -> (i32, i32, i32) {
    %c0_i32 = arith.constant 0 : i32
    %c0_i32_0 = arith.constant 0 : i32
    %c0_i32_1 = arith.constant 0 : i32
    return %arg0, %c0_i32, %c0_i32_0 : i32, i32, i32
  }
  func.func @transform_6(%arg0: i32) -> (i32, i32) {
    %c0_i32 = arith.constant 0 : i32
    %c0_i32_0 = arith.constant 0 : i32
    %c0_i32_1 = arith.constant 0 : i32
    return %c0_i32, %c0_i32_0 : i32, i32
  }
}

</mosaic_0001>

<llo_original>
// kernel: tpu_custom_call.1
$region0: #{tpu_custom_call.1}
  #allocation0 [shape = 'u32[]', space=smem, size = 0x4, offset = 0x4, fixed_abs, tag = 'smem constant byte address 0x4 - core index']
  #allocation1 [shape = 'u32[144,128]{1,0:T(1,128)}', space=vmem, size = 0x12000, scoped, tag = 'internal scratch']
  #allocation2 [shape = 'f32[8,256]{1,0:T(8,128)}', space=vmem, size = 0x2000, scoped, tag = 'scratch operand']
  #allocation3 [shape = 'f32[8,128]{1,0:T(8,128)}', space=vmem, size = 0x1000, scoped, tag = 'scratch operand']
  %s0 = inlined_call_operand.hbm [shape: f32[1,8,128], index: 0, kind: input, shape index: {}]
  %s1 = inlined_call_operand.hbm [shape: f32[8,128], index: 1, kind: input, shape index: {}]
  %s2 = inlined_call_operand.hbm [shape: f32[8,128], index: 2, kind: input, shape index: {}]
  %s3 = inlined_call_operand.hbm [shape: bf16[256,512], index: 3, kind: input, shape index: {}]
  %s4 = inlined_call_operand.vmem [shape: f32[1,512], index: 4, kind: input, shape index: {}]
  %s5 = inlined_call_operand.hbm [shape: f32[1,8,128], index: 5, kind: output, shape index: {0}]
  %s6 = inlined_call_operand.hbm [shape: f32[8,128], index: 6, kind: output, shape index: {1}]
  %7 = xla_tuple %s5, %s6
  %s8 = sld [smem:[#allocation0]]
  $region58: #{tpu_custom_call.1} parent=0
    _
  %s10 = ssub.s32 1, %s8
  %s11 = scalar_select 0, %s10, %s8
  $region1: #{tpu_custom_call.1} parent=0
    #allocation4 [shape = 'u8[4096]{0}', space=vmem, size = 0x1000, scoped, tag = 'input window, operand 0, single buffered']
    #allocation5 [shape = 's32[1]{0}', space=sflag, size = 0x4, scoped, tag = 'scoped memory for tpu_custom_call.1']
    #allocation6 [shape = 's32[1]{0}', space=sflag, size = 0x4, scoped, tag = 'scoped memory for tpu_custom_call.1']
    #allocation7 [shape = 'u8[4096]{0}', space=vmem, size = 0x1000, scoped, tag = 'input window, operand 1, single buffered']
    #allocation8 [shape = 's32[1]{0}', space=sflag, size = 0x4, scoped, tag = 'scoped memory for tpu_custom_call.1']
    #allocation9 [shape = 'u8[4096]{0}', space=vmem, size = 0x1000, scoped, tag = 'input window, operand 2, single buffered']
    #allocation10 [shape = 'u8[262144]{0}', space=vmem, size = 0x40000, scoped, tag = 'input window, operand 3, single buffered']
    #allocation11 [shape = 's32[1]{0}', space=sflag, size = 0x4, scoped, tag = 'scoped memory for tpu_custom_call.1']
    #allocation12 [shape = 'u8[4096]{0}', space=vmem, size = 0x1000, scoped, tag = 'output window, operand 0, single buffered']
    #allocation13 [shape = 'u8[4096]{0}', space=vmem, size = 0x1000, scoped, tag = 'output window, operand 1, single buffered']
    #allocation14 [shape = 's32[1]{0}', space=sflag, size = 0x4, scoped, tag = 'scoped memory for tpu_custom_call.1']
    %12 = vsyncpa [#allocation5], 0
    %13 = vsyncpa [#allocation8], 0
    %14 = vsyncpa [#allocation11], 0
    %15 = vsyncpa [#allocation6], 0
    %16 = vsyncpa [#allocation14], 0
    // Predicated region
    $region2: #{tpu_custom_call.1} parent=1 // pred_check
      _
    $region3: #{tpu_custom_call.1} parent=1 // pred_check_branch
      %18 = sbr.rel (0) target = $region5
    $region4: #{tpu_custom_call.1} parent=1 // pred_region
      %s20 = ssub.s32 128, 128
      %21 = vsyncadd [#allocation5], %s20
      %s23 = sshll.u32 [#allocation4], 4
      %s24 = int_to_ptr.vmem [resolvable:$true] %s23
      %26 = dma.hbm_to_vmem [thread:$0]  %s0, 128, %s24, [#allocation5]
    $region5: #{tpu_custom_call.1} parent=1 // pred_fallthru
      _
    // Predicated region
    $region6: #{tpu_custom_call.1} parent=1 // pred_check
      _
    $region7: #{tpu_custom_call.1} parent=1 // pred_check_branch
      %28 = sbr.rel (0) target = $region9
    $region8: #{tpu_custom_call.1} parent=1 // pred_region
      %s30 = ssub.s32 128, 128
      %31 = vsyncadd [#allocation8], %s30
      %s33 = sshll.u32 [#allocation7], 4
      %s34 = int_to_ptr.vmem [resolvable:$true] %s33
      %36 = dma.hbm_to_vmem [thread:$0]  %s1, 128, %s34, [#allocation8]
    $region9: #{tpu_custom_call.1} parent=1 // pred_fallthru
      _
    // Predicated region
    $region10: #{tpu_custom_call.1} parent=1 // pred_check
      _
    $region11: #{tpu_custom_call.1} parent=1 // pred_check_branch
      %38 = sbr.rel (0) target = $region13
    $region12: #{tpu_custom_call.1} parent=1 // pred_region
      %s40 = ssub.s32 128, 128
      %41 = vsyncadd [#allocation8], %s40
      %s43 = sshll.u32 [#allocation9], 4
      %s44 = int_to_ptr.vmem [resolvable:$true] %s43
      %46 = dma.hbm_to_vmem [thread:$0]  %s2, 128, %s44, [#allocation8]
    $region13: #{tpu_custom_call.1} parent=1 // pred_fallthru
      _
    // Predicated region
    $region14: #{tpu_custom_call.1} parent=1 // pred_check
      _
    $region15: #{tpu_custom_call.1} parent=1 // pred_check_branch
      %48 = sbr.rel (0) target = $region17
    $region16: #{tpu_custom_call.1} parent=1 // pred_region
      %s50 = ssub.s32 8192, 8192
      %51 = vsyncadd [#allocation11], %s50
      %s52 = sshll.u32 [#allocation10], 4
      %s53 = int_to_ptr.vmem [resolvable:$true] %s52
      %58 = dma.hbm_to_vmem [thread:$0]  %s3, 8192, %s53, [#allocation11], 256, 256, 16
    $region17: #{tpu_custom_call.1} parent=1 // pred_fallthru
      _
    // Predicated region
    $region18: #{tpu_custom_call.1} parent=1 // pred_check
      _
    $region19: #{tpu_custom_call.1} parent=1 // pred_check_branch
      %60 = sbr.rel (0) target = $region21
    $region20: #{tpu_custom_call.1} parent=1 // pred_region
      _
    $region21: #{tpu_custom_call.1} parent=1 // pred_fallthru
      _
    // Predicated region
    $region22: #{tpu_custom_call.1} parent=1 // pred_check
      _
    $region23: #{tpu_custom_call.1} parent=1 // pred_check_branch
      %62 = sbr.rel (0) target = $region25
    $region24: #{tpu_custom_call.1} parent=1 // pred_region
      %63 = dma.done [#allocation5], 128
    $region25: #{tpu_custom_call.1} parent=1 // pred_fallthru
      _
    // Predicated region
    $region26: #{tpu_custom_call.1} parent=1 // pred_check
      _
    $region27: #{tpu_custom_call.1} parent=1 // pred_check_branch
      %65 = sbr.rel (0) target = $region29
    $region28: #{tpu_custom_call.1} parent=1 // pred_region
      %66 = dma.done [#allocation8], 128
    $region29: #{tpu_custom_call.1} parent=1 // pred_fallthru
      _
    // Predicated region
    $region30: #{tpu_custom_call.1} parent=1 // pred_check
      _
    $region31: #{tpu_custom_call.1} parent=1 // pred_check_branch
      %68 = sbr.rel (0) target = $region33
    $region32: #{tpu_custom_call.1} parent=1 // pred_region
      %69 = dma.done [#allocation8], 128
    $region33: #{tpu_custom_call.1} parent=1 // pred_fallthru
      _
    // Predicated region
    $region34: #{tpu_custom_call.1} parent=1 // pred_check
      _
    $region35: #{tpu_custom_call.1} parent=1 // pred_check_branch
      %71 = sbr.rel (0) target = $region37
    $region36: #{tpu_custom_call.1} parent=1 // pred_region
      %72 = dma.done [#allocation11], 8192
    $region37: #{tpu_custom_call.1} parent=1 // pred_fallthru
      _
    %p73 = scmp.eq.s32.totalorder 0, 0
    // Predicated region
    $region38: #{tpu_custom_call.1} parent=1 // pred_check
      %p74 = pneg %p73
    $region39: #{tpu_custom_call.1} parent=1 // pred_check_branch
      %76 = sbr.rel (%p74) target = $region41
    $region40: #{tpu_custom_call.1} parent=1 // pred_region
      %v77 = vld [vmem:[#allocation7] sm:$0xff]
      %78 = vst [vmem:[#allocation2 + $0x8] sm:$0xff] %v77
      %v79 = vld [vmem:[#allocation9] sm:$0xff]
      %80 = vst [vmem:[#allocation3] sm:$0xff] %v79
    $region41: #{tpu_custom_call.1} parent=1 // pred_fallthru
      _
    %v81 = vld [vmem:[#allocation4] sm:$0xff]
    %82 = vst [vmem:[#allocation2] sm:$0xff] %v81
    %v83 = vld [vmem:[#allocation2] sm:$0xff]
    %v84 = vld [vmem:[#allocation2 + $0x8] sm:$0xff]
    %v85 = vpack.c.bf16 %v83, %v83
    %v86 = vpack.c.bf16 %v84, %v84
    %v87 = vld [vmem:[#allocation10] sm:$0xff]
    %v88 = vld [vmem:[#allocation10 + $0x8] sm:$0xff]
    %v89 = vld [vmem:[#allocation10 + $0x10] sm:$0xff]
    %v90 = vld [vmem:[#allocation10 + $0x18] sm:$0xff]
    %v91 = vld [vmem:[#allocation10 + $0x20] sm:$0xff]
    %v92 = vld [vmem:[#allocation10 + $0x28] sm:$0xff]
    %v93 = vld [vmem:[#allocation10 + $0x30] sm:$0xff]
    %v94 = vld [vmem:[#allocation10 + $0x38] sm:$0xff]
    %v95 = vld [vmem:[#allocation10 + $0x40] sm:$0xff]
    %v96 = vld [vmem:[#allocation10 + $0x48] sm:$0xff]
    %v97 = vld [vmem:[#allocation10 + $0x50] sm:$0xff]
    %v98 = vld [vmem:[#allocation10 + $0x58] sm:$0xff]
    %v99 = vld [vmem:[#allocation10 + $0x60] sm:$0xff]
    %v100 = vld [vmem:[#allocation10 + $0x68] sm:$0xff]
    %v101 = vld [vmem:[#allocation10 + $0x70] sm:$0xff]
    %v102 = vld [vmem:[#allocation10 + $0x78] sm:$0xff]
    %v103 = vld [vmem:[#allocation10 + $0x80] sm:$0xff]
    %v104 = vld [vmem:[#allocation10 + $0x88] sm:$0xff]
    %v105 = vld [vmem:[#allocation10 + $0x90] sm:$0xff]
    %v106 = vld [vmem:[#allocation10 + $0x98] sm:$0xff]
    %v107 = vld [vmem:[#allocation10 + $0xa0] sm:$0xff]
    %v108 = vld [vmem:[#allocation10 + $0xa8] sm:$0xff]
    %v109 = vld [vmem:[#allocation10 + $0xb0] sm:$0xff]
    %v110 = vld [vmem:[#allocation10 + $0xb8] sm:$0xff]
    %v111 = vld [vmem:[#allocation10 + $0xc0] sm:$0xff]
    %v112 = vld [vmem:[#allocation10 + $0xc8] sm:$0xff]
    %v113 = vld [vmem:[#allocation10 + $0xd0] sm:$0xff]
    %v114 = vld [vmem:[#allocation10 + $0xd8] sm:$0xff]
    %v115 = vld [vmem:[#allocation10 + $0xe0] sm:$0xff]
    %v116 = vld [vmem:[#allocation10 + $0xe8] sm:$0xff]
    %v117 = vld [vmem:[#allocation10 + $0xf0] sm:$0xff]
    %v118 = vld [vmem:[#allocation10 + $0xf8] sm:$0xff]
    %v119 = vld [vmem:[#allocation10 + $0x100] sm:$0xff]
    %v120 = vld [vmem:[#allocation10 + $0x108] sm:$0xff]
    %v121 = vld [vmem:[#allocation10 + $0x110] sm:$0xff]
    %v122 = vld [vmem:[#allocation10 + $0x118] sm:$0xff]
    %v123 = vld [vmem:[#allocation10 + $0x120] sm:$0xff]
    %v124 = vld [vmem:[#allocation10 + $0x128] sm:$0xff]
    %v125 = vld [vmem:[#allocation10 + $0x130] sm:$0xff]
    %v126 = vld [vmem:[#allocation10 + $0x138] sm:$0xff]
    %v127 = vld [vmem:[#allocation10 + $0x140] sm:$0xff]
    %v128 = vld [vmem:[#allocation10 + $0x148] sm:$0xff]
    %v129 = vld [vmem:[#allocation10 + $0x150] sm:$0xff]
    %v130 = vld [vmem:[#allocation10 + $0x158] sm:$0xff]
    %v131 = vld [vmem:[#allocation10 + $0x160] sm:$0xff]
    %v132 = vld [vmem:[#allocation10 + $0x168] sm:$0xff]
    %v133 = vld [vmem:[#allocation10 + $0x170] sm:$0xff]
    %v134 = vld [vmem:[#allocation10 + $0x178] sm:$0xff]
    %v135 = vld [vmem:[#allocation10 + $0x180] sm:$0xff]
    %v136 = vld [vmem:[#allocation10 + $0x188] sm:$0xff]
    %v137 = vld [vmem:[#allocation10 + $0x190] sm:$0xff]
    %v138 = vld [vmem:[#allocation10 + $0x198] sm:$0xff]
    %v139 = vld [vmem:[#allocation10 + $0x1a0] sm:$0xff]
    %v140 = vld [vmem:[#allocation10 + $0x1a8] sm:$0xff]
    %v141 = vld [vmem:[#allocation10 + $0x1b0] sm:$0xff]
    %v142 = vld [vmem:[#allocation10 + $0x1b8] sm:$0xff]
    %v143 = vld [vmem:[#allocation10 + $0x1c0] sm:$0xff]
    %v144 = vld [vmem:[#allocation10 + $0x1c8] sm:$0xff]
    %v145 = vld [vmem:[#allocation10 + $0x1d0] sm:$0xff]
    %v146 = vld [vmem:[#allocation10 + $0x1d8] sm:$0xff]
    %v147 = vld [vmem:[#allocation10 + $0x1e0] sm:$0xff]
    %v148 = vld [vmem:[#allocation10 + $0x1e8] sm:$0xff]
    %v149 = vld [vmem:[#allocation10 + $0x1f0] sm:$0xff]
    %v150 = vld [vmem:[#allocation10 + $0x1f8] sm:$0xff]
    %v151 = vld [vmem:[%s4] sm:$0xf]
    %v153 = vlaneseq
    %v154 = vshrl.u32 %v153, 7
    %v155 = vsub.s32 0, %v154
    %v156 = vrot.slane %v151, %v155
    %v157 = vlaneseq
    %v158 = vshrl.u32 %v157, 7
    %v159 = vsub.s32 1, %v158
    %v160 = vrot.slane %v151, %v159
    %v161 = vlaneseq
    %v162 = vshrl.u32 %v161, 7
    %v163 = vsub.s32 2, %v162
    %v164 = vrot.slane %v151, %v163
    %v165 = vlaneseq
    %v166 = vshrl.u32 %v165, 7
    %v167 = vsub.s32 3, %v166
    %v168 = vrot.slane %v151, %v167
    %v237 = vunpack.c.l.b16 %v87
    %v238 = vunpack.c.h.b16 %v87
    %v239 = vunpack.c.l.b16 %v88
    %v240 = vunpack.c.h.b16 %v88
    %v241 = vunpack.c.l.b16 %v89
    %v242 = vunpack.c.h.b16 %v89
    %v243 = vunpack.c.l.b16 %v90
    %v244 = vunpack.c.h.b16 %v90
    %v245 = vunpack.c.l.b16 %v91
    %v246 = vunpack.c.h.b16 %v91
    %v247 = vunpack.c.l.b16 %v92
    %v248 = vunpack.c.h.b16 %v92
    %v249 = vunpack.c.l.b16 %v93
    %v250 = vunpack.c.h.b16 %v93
    %v251 = vunpack.c.l.b16 %v94
    %v252 = vunpack.c.h.b16 %v94
    %v253 = vunpack.c.l.b16 %v95
    %v254 = vunpack.c.h.b16 %v95
    %v255 = vunpack.c.l.b16 %v96
    %v256 = vunpack.c.h.b16 %v96
    %v257 = vunpack.c.l.b16 %v97
    %v258 = vunpack.c.h.b16 %v97
    %v259 = vunpack.c.l.b16 %v98
    %v260 = vunpack.c.h.b16 %v98
    %v261 = vunpack.c.l.b16 %v99
    %v262 = vunpack.c.h.b16 %v99
    %v263 = vunpack.c.l.b16 %v100
    %v264 = vunpack.c.h.b16 %v100
    %v265 = vunpack.c.l.b16 %v101
    %v266 = vunpack.c.h.b16 %v101
    %v267 = vunpack.c.l.b16 %v102
    %v268 = vunpack.c.h.b16 %v102
    %v269 = vunpack.c.l.b16 %v103
    %v270 = vunpack.c.h.b16 %v103
    %v271 = vunpack.c.l.b16 %v104
    %v272 = vunpack.c.h.b16 %v104
    %v273 = vunpack.c.l.b16 %v105
    %v274 = vunpack.c.h.b16 %v105
    %v275 = vunpack.c.l.b16 %v106
    %v276 = vunpack.c.h.b16 %v106
    %v277 = vunpack.c.l.b16 %v107
    %v278 = vunpack.c.h.b16 %v107
    %v279 = vunpack.c.l.b16 %v108
    %v280 = vunpack.c.h.b16 %v108
    %v281 = vunpack.c.l.b16 %v109
    %v282 = vunpack.c.h.b16 %v109
    %v283 = vunpack.c.l.b16 %v110
    %v284 = vunpack.c.h.b16 %v110
    %v285 = vunpack.c.l.b16 %v111
    %v286 = vunpack.c.h.b16 %v111
    %v287 = vunpack.c.l.b16 %v112
    %v288 = vunpack.c.h.b16 %v112
    %v289 = vunpack.c.l.b16 %v113
    %v290 = vunpack.c.h.b16 %v113
    %v291 = vunpack.c.l.b16 %v114
    %v292 = vunpack.c.h.b16 %v114
    %v293 = vunpack.c.l.b16 %v115
    %v294 = vunpack.c.h.b16 %v115
    %v295 = vunpack.c.l.b16 %v116
    %v296 = vunpack.c.h.b16 %v116
    %v297 = vunpack.c.l.b16 %v117
    %v298 = vunpack.c.h.b16 %v117
    %v299 = vunpack.c.l.b16 %v118
    %v300 = vunpack.c.h.b16 %v118
    %v301 = vunpack.c.l.b16 %v119
    %v302 = vunpack.c.h.b16 %v119
    %v303 = vunpack.c.l.b16 %v120
    %v304 = vunpack.c.h.b16 %v120
    %v305 = vunpack.c.l.b16 %v121
    %v306 = vunpack.c.h.b16 %v121
    %v307 = vunpack.c.l.b16 %v122
    %v308 = vunpack.c.h.b16 %v122
    %v309 = vunpack.c.l.b16 %v123
    %v310 = vunpack.c.h.b16 %v123
    %v311 = vunpack.c.l.b16 %v124
    %v312 = vunpack.c.h.b16 %v124
    %v313 = vunpack.c.l.b16 %v125
    %v314 = vunpack.c.h.b16 %v125
    %v315 = vunpack.c.l.b16 %v126
    %v316 = vunpack.c.h.b16 %v126
    %v317 = vunpack.c.l.b16 %v127
    %v318 = vunpack.c.h.b16 %v127
    %v319 = vunpack.c.l.b16 %v128
    %v320 = vunpack.c.h.b16 %v128
    %v321 = vunpack.c.l.b16 %v129
    %v322 = vunpack.c.h.b16 %v129
    %v323 = vunpack.c.l.b16 %v130
    %v324 = vunpack.c.h.b16 %v130
    %v325 = vunpack.c.l.b16 %v131
    %v326 = vunpack.c.h.b16 %v131
    %v327 = vunpack.c.l.b16 %v132
    %v328 = vunpack.c.h.b16 %v132
    %v329 = vunpack.c.l.b16 %v133
    %v330 = vunpack.c.h.b16 %v133
    %v331 = vunpack.c.l.b16 %v134
    %v332 = vunpack.c.h.b16 %v134
    %v333 = vunpack.c.l.b16 %v135
    %v334 = vunpack.c.h.b16 %v135
    %v335 = vunpack.c.l.b16 %v136
    %v336 = vunpack.c.h.b16 %v136
    %v337 = vunpack.c.l.b16 %v137
    %v338 = vunpack.c.h.b16 %v137
    %v339 = vunpack.c.l.b16 %v138
    %v340 = vunpack.c.h.b16 %v138
    %v341 = vunpack.c.l.b16 %v139
    %v342 = vunpack.c.h.b16 %v139
    %v343 = vunpack.c.l.b16 %v140
    %v344 = vunpack.c.h.b16 %v140
    %v345 = vunpack.c.l.b16 %v141
    %v346 = vunpack.c.h.b16 %v141
    %v347 = vunpack.c.l.b16 %v142
    %v348 = vunpack.c.h.b16 %v142
    %v349 = vunpack.c.l.b16 %v143
    %v350 = vunpack.c.h.b16 %v143
    %v351 = vunpack.c.l.b16 %v144
    %v352 = vunpack.c.h.b16 %v144
    %v353 = vunpack.c.l.b16 %v145
    %v354 = vunpack.c.h.b16 %v145
    %v355 = vunpack.c.l.b16 %v146
    %v356 = vunpack.c.h.b16 %v146
    %v357 = vunpack.c.l.b16 %v147
    %v358 = vunpack.c.h.b16 %v147
    %v359 = vunpack.c.l.b16 %v148
    %v360 = vunpack.c.h.b16 %v148
    %v361 = vunpack.c.l.b16 %v149
    %v362 = vunpack.c.h.b16 %v149
    %v363 = vunpack.c.l.b16 %v150
    %v364 = vunpack.c.h.b16 %v150
    %v365 = vpack.c.b16 %v241, %v237
    %v366 = vpack.c.b16 %v242, %v238
    %v367 = vpack.c.b16 %v243, %v239
    %v368 = vpack.c.b16 %v244, %v240
    %v369 = vpack.c.b16 %v249, %v245
    %v370 = vpack.c.b16 %v250, %v246
    %v371 = vpack.c.b16 %v251, %v247
    %v372 = vpack.c.b16 %v252, %v248
    %v373 = vpack.c.b16 %v257, %v253
    %v374 = vpack.c.b16 %v258, %v254
    %v375 = vpack.c.b16 %v259, %v255
    %v376 = vpack.c.b16 %v260, %v256
    %v377 = vpack.c.b16 %v265, %v261
    %v378 = vpack.c.b16 %v266, %v262
    %v379 = vpack.c.b16 %v267, %v263
    %v380 = vpack.c.b16 %v268, %v264
    %v381 = vpack.c.b16 %v273, %v269
    %v382 = vpack.c.b16 %v274, %v270
    %v383 = vpack.c.b16 %v275, %v271
    %v384 = vpack.c.b16 %v276, %v272
    %v385 = vpack.c.b16 %v281, %v277
    %v386 = vpack.c.b16 %v282, %v278
    %v387 = vpack.c.b16 %v283, %v279
    %v388 = vpack.c.b16 %v284, %v280
    %v389 = vpack.c.b16 %v289, %v285
    %v390 = vpack.c.b16 %v290, %v286
    %v391 = vpack.c.b16 %v291, %v287
    %v392 = vpack.c.b16 %v292, %v288
    %v393 = vpack.c.b16 %v297, %v293
    %v394 = vpack.c.b16 %v298, %v294
    %v395 = vpack.c.b16 %v299, %v295
    %v396 = vpack.c.b16 %v300, %v296
    %v397 = vpack.c.b16 %v305, %v301
    %v398 = vpack.c.b16 %v306, %v302
    %v399 = vpack.c.b16 %v307, %v303
    %v400 = vpack.c.b16 %v308, %v304
    %v401 = vpack.c.b16 %v313, %v309
    %v402 = vpack.c.b16 %v314, %v310
    %v403 = vpack.c.b16 %v315, %v311
    %v404 = vpack.c.b16 %v316, %v312
    %v405 = vpack.c.b16 %v321, %v317
    %v406 = vpack.c.b16 %v322, %v318
    %v407 = vpack.c.b16 %v323, %v319
    %v408 = vpack.c.b16 %v324, %v320
    %v409 = vpack.c.b16 %v329, %v325
    %v410 = vpack.c.b16 %v330, %v326
    %v411 = vpack.c.b16 %v331, %v327
    %v412 = vpack.c.b16 %v332, %v328
    %v413 = vpack.c.b16 %v337, %v333
    %v414 = vpack.c.b16 %v338, %v334
    %v415 = vpack.c.b16 %v339, %v335
    %v416 = vpack.c.b16 %v340, %v336
    %v417 = vpack.c.b16 %v345, %v341
    %v418 = vpack.c.b16 %v346, %v342
    %v419 = vpack.c.b16 %v347, %v343
    %v420 = vpack.c.b16 %v348, %v344
    %v421 = vpack.c.b16 %v353, %v349
    %v422 = vpack.c.b16 %v354, %v350
    %v423 = vpack.c.b16 %v355, %v351
    %v424 = vpack.c.b16 %v356, %v352
    %v425 = vpack.c.b16 %v361, %v357
    %v426 = vpack.c.b16 %v362, %v358
    %v427 = vpack.c.b16 %v363, %v359
    %v428 = vpack.c.b16 %v364, %v360
    %493 = vmatprep.subr.bf16.mxu0 %v366
    %494 = vmatpush1.bf16.msra.mxu0 %v365
    %495 = vmatprep.subr.bf16.mxu0 %v370
    %496 = vmatpush1.bf16.msra.mxu0 %v369
    %497 = vmatprep.subr.bf16.mxu0 %v374
    %498 = vmatpush1.bf16.msra.mxu0 %v373
    %499 = vmatprep.subr.bf16.mxu0 %v378
    %500 = vmatpush1.bf16.msra.mxu0 %v377
    %501 = vmatprep.subr.bf16.mxu0 %v382
    %502 = vmatpush1.bf16.msra.mxu0 %v381
    %503 = vmatprep.subr.bf16.mxu0 %v386
    %504 = vmatpush1.bf16.msra.mxu0 %v385
    %505 = vmatprep.subr.bf16.mxu0 %v390
    %506 = vmatpush1.bf16.msra.mxu0 %v389
    %507 = vmatprep.subr.bf16.mxu0 %v394
    %508 = vmatpush1.bf16.msra.mxu0 %v393
    %509 = vmatprep.subr.bf16.mxu0 %v398
    %510 = vmatpush1.bf16.msra.mxu0 %v397
    %511 = vmatprep.subr.bf16.mxu0 %v402
    %512 = vmatpush1.bf16.msra.mxu0 %v401
    %513 = vmatprep.subr.bf16.mxu0 %v406
    %514 = vmatpush1.bf16.msra.mxu0 %v405
    %515 = vmatprep.subr.bf16.mxu0 %v410
    %516 = vmatpush1.bf16.msra.mxu0 %v409
    %517 = vmatprep.subr.bf16.mxu0 %v414
    %518 = vmatpush1.bf16.msra.mxu0 %v413
    %519 = vmatprep.subr.bf16.mxu0 %v418
    %520 = vmatpush1.bf16.msra.mxu0 %v417
    %521 = vmatprep.subr.bf16.mxu0 %v422
    %522 = vmatpush1.bf16.msra.mxu0 %v421
    %523 = vmatprep.subr.bf16.mxu0 %v426
    %524 = vmatpush1.bf16.msra.mxu0 %v425
    %525 = vmatprep.mubr.bf16.mxu0 %v86
    %526 = vmatmul.mubr.bf16.gmra.mrb[0].mxu0 %v85
    %v527 = vpop.f32.mrb[0].mxu0
    %v528 = vadd.f32 %v156, %v527
    %v529 = vpop.f32.mrb[0].mxu0
    %v530 = vadd.f32 %v160, %v529
    %v531 = vpop.f32.mrb[0].mxu0
    %v532 = vpop.f32.mrb[0].mxu0
    %533 = vdwg.mxu0
    %534 = vmatprep.subr.bf16.mxu0 %v368
    %535 = vmatpush1.bf16.msra.mxu0 %v367
    %536 = vmatprep.subr.bf16.mxu0 %v372
    %537 = vmatpush1.bf16.msra.mxu0 %v371
    %538 = vmatprep.subr.bf16.mxu0 %v376
    %539 = vmatpush1.bf16.msra.mxu0 %v375
    %540 = vmatprep.subr.bf16.mxu0 %v380
    %541 = vmatpush1.bf16.msra.mxu0 %v379
    %542 = vmatprep.subr.bf16.mxu0 %v384
    %543 = vmatpush1.bf16.msra.mxu0 %v383
    %544 = vmatprep.subr.bf16.mxu0 %v388
    %545 = vmatpush1.bf16.msra.mxu0 %v387
    %546 = vmatprep.subr.bf16.mxu0 %v392
    %547 = vmatpush1.bf16.msra.mxu0 %v391
    %548 = vmatprep.subr.bf16.mxu0 %v396
    %549 = vmatpush1.bf16.msra.mxu0 %v395
    %550 = vmatprep.subr.bf16.mxu0 %v400
    %551 = vmatpush1.bf16.msra.mxu0 %v399
    %552 = vmatprep.subr.bf16.mxu0 %v404
    %553 = vmatpush1.bf16.msra.mxu0 %v403
    %554 = vmatprep.subr.bf16.mxu0 %v408
    %555 = vmatpush1.bf16.msra.mxu0 %v407
    %556 = vmatprep.subr.bf16.mxu0 %v412
    %557 = vmatpush1.bf16.msra.mxu0 %v411
    %558 = vmatprep.subr.bf16.mxu0 %v416
    %559 = vmatpush1.bf16.msra.mxu0 %v415
    %560 = vmatprep.subr.bf16.mxu0 %v420
    %561 = vmatpush1.bf16.msra.mxu0 %v419
    %562 = vmatprep.subr.bf16.mxu0 %v424
    %563 = vmatpush1.bf16.msra.mxu0 %v423
    %564 = vmatprep.subr.bf16.mxu0 %v428
    %565 = vmatpush1.bf16.msra.mxu0 %v427
    %566 = vmatprep.mubr.bf16.mxu0 %v86
    %567 = vmatmul.mubr.bf16.gmra.mrb[0].mxu0 %v85
    %v568 = vpop.f32.mrb[0].mxu0
    %v569 = vadd.f32 %v164, %v568
    %v570 = vpop.f32.mrb[0].mxu0
    %v571 = vadd.f32 %v168, %v570
    %v572 = vpop.f32.mrb[0].mxu0
    %v573 = vpop.f32.mrb[0].mxu0
    %574 = vdwg.mxu0
    %v575 = vxor.u32 %v528, 2147483648
    %v576 = vmul.f32 %v575, 1.442695
    %v577 = vpow.pop %v576
    %v578 = vadd.f32 %v577, 1.0
    %v579 = vrcp.pop %v578
    %v580 = vmul.f32 1.0, %v579
    %v581 = vxor.u32 %v530, 2147483648
    %v582 = vmul.f32 %v581, 1.442695
    %v583 = vpow.pop %v582
    %v584 = vadd.f32 %v583, 1.0
    %v585 = vrcp.pop %v584
    %v586 = vmul.f32 1.0, %v585
    %v587 = vtanh.pop %v569
    %v588 = vxor.u32 %v571, 2147483648
    %v589 = vmul.f32 %v588, 1.442695
    %v590 = vpow.pop %v589
    %v591 = vadd.f32 %v590, 1.0
    %v592 = vrcp.pop %v591
    %v593 = vmul.f32 1.0, %v592
    %v594 = vld [vmem:[#allocation3] sm:$0xff]
    %v595 = vmul.f32 %v586, %v594
    %v596 = vmul.f32 %v580, %v587
    %v597 = vadd.f32 %v595, %v596
    %v598 = vtanh.pop %v597
    %v599 = vmul.f32 %v593, %v598
    %600 = vst [vmem:[#allocation12] sm:$0xff] %v599
    %601 = vst [vmem:[#allocation2 + $0x8] sm:$0xff] %v599
    %602 = vst [vmem:[#allocation3] sm:$0xff] %v597
    %v603 = vld [vmem:[#allocation3] sm:$0xff]
    %604 = vst [vmem:[#allocation13] sm:$0xff] %v603
    // Predicated region
    $region42: #{tpu_custom_call.1} parent=1 // pred_check
      _
    $region43: #{tpu_custom_call.1} parent=1 // pred_check_branch
      %606 = sbr.rel (0) target = $region45
    $region44: #{tpu_custom_call.1} parent=1 // pred_region
      %s608 = ssub.s32 128, 128
      %609 = vsyncadd [#allocation6], %s608
      %s611 = sshll.u32 [#allocation12], 4
      %s612 = int_to_ptr.vmem [resolvable:$true] %s611
      %614 = dma.vmem_to_hbm [thread:$0]  %s612, 128, %s5, [#allocation6]
    $region45: #{tpu_custom_call.1} parent=1 // pred_fallthru
      _
    // Predicated region
    $region46: #{tpu_custom_call.1} parent=1 // pred_check
      _
    $region47: #{tpu_custom_call.1} parent=1 // pred_check_branch
      %616 = sbr.rel (0) target = $region49
    $region48: #{tpu_custom_call.1} parent=1 // pred_region
      %s618 = ssub.s32 128, 128
      %619 = vsyncadd [#allocation14], %s618
      %s621 = sshll.u32 [#allocation13], 4
      %s622 = int_to_ptr.vmem [resolvable:$true] %s621
      %624 = dma.vmem_to_hbm [thread:$0]  %s622, 128, %s6, [#allocation14]
    $region49: #{tpu_custom_call.1} parent=1 // pred_fallthru
      _
    // Predicated region
    $region50: #{tpu_custom_call.1} parent=1 // pred_check
      _
    $region51: #{tpu_custom_call.1} parent=1 // pred_check_branch
      %626 = sbr.rel (0) target = $region53
    $region52: #{tpu_custom_call.1} parent=1 // pred_region
      %627 = dma.done [#allocation6], 128
    $region53: #{tpu_custom_call.1} parent=1 // pred_fallthru
      _
    // Predicated region
    $region54: #{tpu_custom_call.1} parent=1 // pred_check
      _
    $region55: #{tpu_custom_call.1} parent=1 // pred_check_branch
      %629 = sbr.rel (0) target = $region57
    $region56: #{tpu_custom_call.1} parent=1 // pred_region
      %630 = dma.done [#allocation14], 128
    $region57: #{tpu_custom_call.1} parent=1 // pred_fallthru
      _
    %631 = vsyncpa [#allocation5], 1
    %632 = vsyncpa [#allocation8], 1
    %633 = vsyncpa [#allocation11], 1
    %634 = vsyncpa [#allocation6], 1
    %635 = vsyncpa [#allocation14], 1

</llo_original>
